<compile_context>
chip_gen: v7x
topology: tpu7x:2x2x1
jax: 0.10.0
libtpu: 0.0.40
codegen_flags: <defaults>
</compile_context>

<pallas_src>
import functools

import jax
import jax.numpy as jnp
from jax.experimental import pallas as pl
from jax.experimental.pallas import tpu as pltpu


# --------------------------------------------------------------------------- #
# Kernels
# --------------------------------------------------------------------------- #
def _log_softmax(preds):
    m = jnp.max(preds, axis=-1, keepdims=True)
    lse = jnp.log(jnp.sum(jnp.exp(preds - m), axis=-1, keepdims=True)) + m
    return preds - lse


def _vh_vpu(v_ref, wv_ref):
    # velocity encoder on the VPU: (B,1)*(1,Ng) broadcast FMAs, no MXU, no padding
    return (v_ref[:, 0:1] * wv_ref[0:1, :] +
            v_ref[:, 1:2] * wv_ref[1:2, :]).astype(jnp.float32)


def _upi_kernel_folded(v_ref, p0_ref, wv_ref, wpr_ref, wd_ref, out_ref,
                       *, log_softmax: bool):
    """g = relu(p0 @ W_pr + vh);  preds = g @ Wd.  W_pr = (Wr @ Wp)^T folded offline."""
    vh = _vh_vpu(v_ref, wv_ref)                                   # (B, Ng)  VPU
    g = jnp.maximum(
        jnp.dot(p0_ref[...].astype(wpr_ref.dtype), wpr_ref[...],
                preferred_element_type=jnp.float32) + vh, 0.0)     # (B, Ng)  MXU
    preds = jnp.dot(g.astype(wd_ref.dtype), wd_ref[...],
                    preferred_element_type=jnp.float32)            # (B, Np)  MXU
    if log_softmax:
        preds = _log_softmax(preds)
    out_ref[...] = preds.astype(out_ref.dtype)


def _upi_kernel_unfolded(v_ref, p0_ref, wv_ref, wp_ref, wr_ref, wd_ref, out_ref,
                         *, log_softmax: bool):
    """Unfolded (training-style) path: keeps Wp and Wr separate."""
    vh = _vh_vpu(v_ref, wv_ref)                                   # (B, Ng)  VPU
    ph = jnp.dot(p0_ref[...].astype(wp_ref.dtype), wp_ref[...],
                 preferred_element_type=jnp.float32)               # (B, Ng)
    g = jnp.maximum(
        jnp.dot(ph.astype(wr_ref.dtype), wr_ref[...],
                preferred_element_type=jnp.float32) + vh, 0.0)     # (B, Ng)
    preds = jnp.dot(g.astype(wd_ref.dtype), wd_ref[...],
                    preferred_element_type=jnp.float32)            # (B, Np)
    if log_softmax:
        preds = _log_softmax(preds)
    out_ref[...] = preds.astype(out_ref.dtype)


# --------------------------------------------------------------------------- #
# One-time parameter preparation (hoisted out of the forward path)
# --------------------------------------------------------------------------- #
def prepare_params(w_v, w_p, w_r, w_d, *, fold_recurrence=True,
                   weight_dtype=jnp.bfloat16):
    """Transpose / fold / cast the torch-layout weights ONCE.

    w_v: (Ng, 2), w_p: (Ng, Np), w_r: (Ng, Ng), w_d: (Np, Ng)   (torch (out,in))
    fold_recurrence=True removes w_r from the hot path (inference; exact in
    real arithmetic).  weight_dtype=bfloat16 halves weight DMA bytes.
    """
    w_v = jnp.asarray(w_v, jnp.float32)
    w_p = jnp.asarray(w_p, jnp.float32)
    w_r = jnp.asarray(w_r, jnp.float32)
    w_d = jnp.asarray(w_d, jnp.float32)

    params = {
        "folded": bool(fold_recurrence),
        # velocity encoder kept tiny and in f32: (2, Ng), used on the VPU
        "wv_t": w_v.T,
        "wd_t": w_d.T.astype(weight_dtype),                       # (Ng, Np)
    }
    if fold_recurrence:
        params["wpr_t"] = (w_r @ w_p).T.astype(weight_dtype)       # (Np, Ng)
    else:
        params["wp_t"] = w_p.T.astype(weight_dtype)                # (Np, Ng)
        params["wr_t"] = w_r.T.astype(weight_dtype)                # (Ng, Ng)
    return params


# --------------------------------------------------------------------------- #
# Forward wrapper
# --------------------------------------------------------------------------- #
def unit_path_integrator_forward(v_seq, p0_seq, params, log_softmax=False):
    """Pallas equivalent of UnitPathIntegrator.forward((v, p0), log_softmax).

    v_seq : (B, seq, 2), p0_seq : (B, seq, Np); only t=0 is used (as in g()).
    params: output of prepare_params().  Returns (B, Np) float32.
    Note: for throughput, batch rows so B is >= 128 per call — weight DMA is
    the bottleneck and is amortized over B.
    """
    v = v_seq[:, 0, :].astype(jnp.float32)                        # (B, 2)
    p0 = p0_seq[:, 0, :].astype(jnp.float32)                      # (B, Np)
    B = v.shape[0]
    Ng, Np = params["wd_t"].shape

    if params["folded"]:
        kernel = functools.partial(_upi_kernel_folded, log_softmax=log_softmax)
        ins = (v, p0, params["wv_t"], params["wpr_t"], params["wd_t"])
        flops = 4 * B * Ng * Np + 4 * B * Ng
    else:
        kernel = functools.partial(_upi_kernel_unfolded, log_softmax=log_softmax)
        ins = (v, p0, params["wv_t"], params["wp_t"], params["wr_t"],
               params["wd_t"])
        flops = 4 * B * Ng * Np + 2 * B * Ng * Ng + 4 * B * Ng

    out_bytes = B * Np * 4
    bytes_accessed = sum(int(x.size) * x.dtype.itemsize for x in ins) + out_bytes
    cost = pl.CostEstimate(
        flops=flops,
        transcendentals=B * Np if log_softmax else 0,
        bytes_accessed=bytes_accessed,
    )

    vmem = pl.BlockSpec(memory_space=pltpu.MemorySpace.VMEM)
    return pl.pallas_call(
        kernel,
        out_shape=jax.ShapeDtypeStruct((B, Np), jnp.float32),
        in_specs=[vmem] * len(ins),
        out_specs=vmem,
        compiler_params=pltpu.CompilerParams(vmem_limit_bytes=32 * 1024 * 1024),
        cost_estimate=cost,
    )(*ins)


# --------------------------------------------------------------------------- #
# Pure-JAX reference (mirrors the torch module exactly, f32)
# --------------------------------------------------------------------------- #
def _reference_forward(v_seq, p0_seq, w_v, w_p, w_r, w_d, log_softmax=False):
    v = v_seq[:, 0, :]
    p0 = p0_seq[:, 0, :]
    vh = v @ w_v.T
    ph = p0 @ w_p.T
    g = jax.nn.relu(ph @ w_r.T + vh)
    preds = g @ w_d.T
    return jax.nn.log_softmax(preds, axis=-1) if log_softmax else preds


if __name__ == "__main__":
    # small shapes consistent with the module (scaled-down Ng/Np)
    B, SEQ, NG, NP = 8, 8, 512, 256

    key = jax.random.PRNGKey(0)
    k1, k2, k3, k4, k5, k6 = jax.random.split(key, 6)

    # torch.nn.Linear weight layout = (out_features, in_features)
    w_v = jax.random.normal(k1, (NG, 2), jnp.float32) * 0.05
    w_p = jax.random.normal(k2, (NG, NP), jnp.float32) * 0.05
    w_r = jax.random.normal(k3, (NG, NG), jnp.float32) * 0.02
    w_d = jax.random.normal(k4, (NP, NG), jnp.float32) * 0.02

    # inputs = (v, p0) with a sequence axis (only t=0 is used by the module)
    v_seq = jax.random.normal(k5, (B, SEQ, 2), jnp.float32)
    p0_seq = jax.random.normal(k6, (B, SEQ, NP), jnp.float32)

    ref = _reference_forward(v_seq, p0_seq, w_v, w_p, w_r, w_d)
    ref_ls = _reference_forward(v_seq, p0_seq, w_v, w_p, w_r, w_d,
                                log_softmax=True)

    # --- default path: folded recurrence + bf16 weights (inference-optimized) ---
    params = prepare_params(w_v, w_p, w_r, w_d)   # fold=True, bf16 (done ONCE)
    out = jax.block_until_ready(
        unit_path_integrator_forward(v_seq, p0_seq, params, log_softmax=False))
    assert out.shape == (B, NP)
    assert jnp.allclose(out, ref, atol=2e-2, rtol=2e-2)   # bf16 weights → loosened tol

    out_ls = jax.block_until_ready(
        unit_path_integrator_forward(v_seq, p0_seq, params, log_softmax=True))
    assert jnp.allclose(out_ls, ref_ls, atol=2e-2, rtol=2e-2)

    # --- unfolded f32 path (training-style, weights kept separate): tight match ---
    params_f32 = prepare_params(w_v, w_p, w_r, w_d,
                                fold_recurrence=False, weight_dtype=jnp.float32)
    out_f32 = jax.block_until_ready(
        unit_path_integrator_forward(v_seq, p0_seq, params_f32, log_softmax=False))
    assert jnp.allclose(out_f32, ref, atol=1e-3, rtol=1e-3)

    print("KERNEL_OK")
</pallas_src>

<mosaic_0001>
module attributes {stable_mosaic.version = 11 : i64} {
  func.func @_upi_kernel_folded(%arg0: memref<8x2xf32, #tpu.memory_space<vmem>>, %arg1: memref<8x256xf32, #tpu.memory_space<vmem>>, %arg2: memref<2x512xf32, #tpu.memory_space<vmem>>, %arg3: memref<256x512xbf16, #tpu.memory_space<vmem>>, %arg4: memref<512x256xbf16, #tpu.memory_space<vmem>>, %arg5: memref<8x256xf32, #tpu.memory_space<vmem>>) attributes {dimension_semantics = [], scalar_prefetch = 0 : i64, scratch_operands = 0 : i64, tpu.core_type = #tpu.core_type<tc>} {
    %c0 = arith.constant 0 : index
    %c0_0 = arith.constant 0 : index
    %0 = vector.load %arg0[%c0, %c0_0] : memref<8x2xf32, #tpu.memory_space<vmem>>, vector<8x1xf32>
    %c0_1 = arith.constant 0 : index
    %c0_2 = arith.constant 0 : index
    %1 = vector.load %arg2[%c0_1, %c0_2] : memref<2x512xf32, #tpu.memory_space<vmem>>, vector<1x512xf32>
    %2 = vector.broadcast %0 : vector<8x1xf32> to vector<8x512xf32>
    %3 = vector.broadcast %1 : vector<1x512xf32> to vector<8x512xf32>
    %4 = arith.mulf %2, %3 : vector<8x512xf32>
    %c0_3 = arith.constant 0 : index
    %c1 = arith.constant 1 : index
    %5 = vector.load %arg0[%c0_3, %c1] : memref<8x2xf32, #tpu.memory_space<vmem>>, vector<8x1xf32>
    %c1_4 = arith.constant 1 : index
    %c0_5 = arith.constant 0 : index
    %6 = vector.load %arg2[%c1_4, %c0_5] : memref<2x512xf32, #tpu.memory_space<vmem>>, vector<1x512xf32>
    %7 = vector.broadcast %5 : vector<8x1xf32> to vector<8x512xf32>
    %8 = vector.broadcast %6 : vector<1x512xf32> to vector<8x512xf32>
    %9 = arith.mulf %7, %8 : vector<8x512xf32>
    %10 = arith.addf %4, %9 : vector<8x512xf32>
    %c0_6 = arith.constant 0 : index
    %c0_7 = arith.constant 0 : index
    %11 = vector.load %arg1[%c0_6, %c0_7] : memref<8x256xf32, #tpu.memory_space<vmem>>, vector<8x256xf32>
    %12 = arith.truncf %11 : vector<8x256xf32> to vector<8x256xbf16>
    %c0_8 = arith.constant 0 : index
    %c0_9 = arith.constant 0 : index
    %13 = vector.load %arg3[%c0_8, %c0_9] : memref<256x512xbf16, #tpu.memory_space<vmem>>, vector<256x512xbf16>
    %cst = arith.constant dense<0.000000e+00> : vector<8x512xf32>
    %14 = tpu.matmul %12, %13, %cst {dimension_numbers = #tpu.dot_dimension_numbers<[1], [0], [0], [1], [0, 0, 1, 1], [], []>} : vector<8x256xbf16>, vector<256x512xbf16>, vector<8x512xf32> -> vector<8x512xf32>
    %15 = arith.addf %14, %10 : vector<8x512xf32>
    %cst_10 = arith.constant 0.000000e+00 : f32
    %16 = vector.broadcast %cst_10 : f32 to vector<8x512xf32>
    %17 = arith.maximumf %15, %16 : vector<8x512xf32>
    %18 = arith.truncf %17 : vector<8x512xf32> to vector<8x512xbf16>
    %c0_11 = arith.constant 0 : index
    %c0_12 = arith.constant 0 : index
    %19 = vector.load %arg4[%c0_11, %c0_12] : memref<512x256xbf16, #tpu.memory_space<vmem>>, vector<512x256xbf16>
    %cst_13 = arith.constant dense<0.000000e+00> : vector<8x256xf32>
    %20 = tpu.matmul %18, %19, %cst_13 {dimension_numbers = #tpu.dot_dimension_numbers<[1], [0], [0], [1], [0, 0, 1, 1], [], []>} : vector<8x512xbf16>, vector<512x256xbf16>, vector<8x256xf32> -> vector<8x256xf32>
    %c0_14 = arith.constant 0 : index
    %c0_15 = arith.constant 0 : index
    %21 = vector.load %arg5[%c0_14, %c0_15] : memref<8x256xf32, #tpu.memory_space<vmem>>, vector<8x256xf32>
    tpu.vector_store %arg5[%c0_14, %c0_15], %20 {strides = array<i32>} : memref<8x256xf32, #tpu.memory_space<vmem>>, vector<8x256xf32>,
    return
  }
}

</mosaic_0001>

<llo_original>
// kernel: tpu_custom_call.1
$region0: #{tpu_custom_call.1}
  #allocation0 [shape = 'u32[]', space=smem, size = 0x4, offset = 0x4, fixed_abs, tag = 'smem constant byte address 0x4 - core index']
  #allocation1 [shape = 'u32[144,128]{1,0:T(1,128)}', space=vmem, size = 0x12000, scoped, tag = 'internal scratch']
  %s0 = inlined_call_operand.vmem [shape: f32[8,2], index: 0, kind: input, shape index: {}]
  %s1 = inlined_call_operand.hbm [shape: f32[8,256], index: 1, kind: input, shape index: {}]
  %s2 = inlined_call_operand.vmem [shape: f32[2,512], index: 2, kind: input, shape index: {}]
  %s3 = inlined_call_operand.hbm [shape: bf16[256,512], index: 3, kind: input, shape index: {}]
  %s4 = inlined_call_operand.hbm [shape: bf16[512,256], index: 4, kind: input, shape index: {}]
  %s5 = inlined_call_operand.hbm [shape: f32[8,256], index: 5, kind: output, shape index: {}]
  %s6 = sld [smem:[#allocation0]]
  $region42: #{tpu_custom_call.1} parent=0
    _
  %s8 = ssub.s32 1, %s6
  %s9 = scalar_select 0, %s8, %s6
  $region1: #{tpu_custom_call.1} parent=0
    #allocation2 [shape = 'u8[8192]{0}', space=vmem, size = 0x2000, scoped, tag = 'input window, operand 1, single buffered']
    #allocation3 [shape = 's32[1]{0}', space=sflag, size = 0x4, scoped, tag = 'scoped memory for tpu_custom_call.1']
    #allocation4 [shape = 's32[1]{0}', space=sflag, size = 0x4, scoped, tag = 'scoped memory for tpu_custom_call.1']
    #allocation5 [shape = 'u8[262144]{0}', space=vmem, size = 0x40000, scoped, tag = 'input window, operand 3, single buffered']
    #allocation6 [shape = 's32[1]{0}', space=sflag, size = 0x4, scoped, tag = 'scoped memory for tpu_custom_call.1']
    #allocation7 [shape = 'u8[262144]{0}', space=vmem, size = 0x40000, scoped, tag = 'input window, operand 4, single buffered']
    #allocation8 [shape = 'u8[8192]{0}', space=vmem, size = 0x2000, scoped, tag = 'output window, operand 0, single buffered']
    %10 = vsyncpa [#allocation3], 0
    %11 = vsyncpa [#allocation6], 0
    %12 = vsyncpa [#allocation4], 0
    // Predicated region
    $region2: #{tpu_custom_call.1} parent=1 // pred_check
      _
    $region3: #{tpu_custom_call.1} parent=1 // pred_check_branch
      %14 = sbr.rel (0) target = $region5
    $region4: #{tpu_custom_call.1} parent=1 // pred_region
      _
    $region5: #{tpu_custom_call.1} parent=1 // pred_fallthru
      _
    // Predicated region
    $region6: #{tpu_custom_call.1} parent=1 // pred_check
      _
    $region7: #{tpu_custom_call.1} parent=1 // pred_check_branch
      %16 = sbr.rel (0) target = $region9
    $region8: #{tpu_custom_call.1} parent=1 // pred_region
      %s18 = ssub.s32 256, 256
      %19 = vsyncadd [#allocation3], %s18
      %s21 = sshll.u32 [#allocation2], 4
      %s22 = int_to_ptr.vmem [resolvable:$true] %s21
      %24 = dma.hbm_to_vmem [thread:$0]  %s1, 256, %s22, [#allocation3]
    $region9: #{tpu_custom_call.1} parent=1 // pred_fallthru
      _
    // Predicated region
    $region10: #{tpu_custom_call.1} parent=1 // pred_check
      _
    $region11: #{tpu_custom_call.1} parent=1 // pred_check_branch
      %26 = sbr.rel (0) target = $region13
    $region12: #{tpu_custom_call.1} parent=1 // pred_region
      _
    $region13: #{tpu_custom_call.1} parent=1 // pred_fallthru
      _
    // Predicated region
    $region14: #{tpu_custom_call.1} parent=1 // pred_check
      _
    $region15: #{tpu_custom_call.1} parent=1 // pred_check_branch
      %28 = sbr.rel (0) target = $region17
    $region16: #{tpu_custom_call.1} parent=1 // pred_region
      %s30 = ssub.s32 8192, 8192
      %31 = vsyncadd [#allocation6], %s30
      %s32 = sshll.u32 [#allocation5], 4
      %s33 = int_to_ptr.vmem [resolvable:$true] %s32
      %38 = dma.hbm_to_vmem [thread:$0]  %s3, 8192, %s33, [#allocation6], 256, 256, 16
    $region17: #{tpu_custom_call.1} parent=1 // pred_fallthru
      _
    // Predicated region
    $region18: #{tpu_custom_call.1} parent=1 // pred_check
      _
    $region19: #{tpu_custom_call.1} parent=1 // pred_check_branch
      %40 = sbr.rel (0) target = $region21
    $region20: #{tpu_custom_call.1} parent=1 // pred_region
      %s42 = ssub.s32 8192, 8192
      %43 = vsyncadd [#allocation6], %s42
      %s44 = sshll.u32 [#allocation7], 4
      %s45 = int_to_ptr.vmem [resolvable:$true] %s44
      %50 = dma.hbm_to_vmem [thread:$0]  %s4, 8192, %s45, [#allocation6], 128, 128, 8
    $region21: #{tpu_custom_call.1} parent=1 // pred_fallthru
      _
    // Predicated region
    $region22: #{tpu_custom_call.1} parent=1 // pred_check
      _
    $region23: #{tpu_custom_call.1} parent=1 // pred_check_branch
      %52 = sbr.rel (0) target = $region25
    $region24: #{tpu_custom_call.1} parent=1 // pred_region
      %53 = dma.done [#allocation3], 256
    $region25: #{tpu_custom_call.1} parent=1 // pred_fallthru
      _
    // Predicated region
    $region26: #{tpu_custom_call.1} parent=1 // pred_check
      _
    $region27: #{tpu_custom_call.1} parent=1 // pred_check_branch
      %55 = sbr.rel (0) target = $region29
    $region28: #{tpu_custom_call.1} parent=1 // pred_region
      %56 = dma.done [#allocation6], 8192
    $region29: #{tpu_custom_call.1} parent=1 // pred_fallthru
      _
    // Predicated region
    $region30: #{tpu_custom_call.1} parent=1 // pred_check
      _
    $region31: #{tpu_custom_call.1} parent=1 // pred_check_branch
      %58 = sbr.rel (0) target = $region33
    $region32: #{tpu_custom_call.1} parent=1 // pred_region
      %59 = dma.done [#allocation6], 8192
    $region33: #{tpu_custom_call.1} parent=1 // pred_fallthru
      _
    %v60 = vld [vmem:[%s0] sm:$0xff]
    %v61 = vld [vmem:[%s2] ss:$2 sm:$0xf]
    %63 = vset.pattern.permute.xlu0 0
    %64 = vperm.xlu0 %63, %v60
    %v65 = vpop.permute.xlu0 %64
    %v68 = vlaneseq
    %v69 = vshrl.u32 %v68, 7
    %v70 = vsub.s32 0, %v69
    %v71 = vrot.slane %v61, %v70
    %v72 = vlaneseq
    %v73 = vshrl.u32 %v72, 7
    %v74 = vsub.s32 1, %v73
    %v75 = vrot.slane %v61, %v74
    %v76 = vlaneseq
    %v77 = vshrl.u32 %v76, 7
    %v78 = vsub.s32 2, %v77
    %v79 = vrot.slane %v61, %v78
    %v80 = vlaneseq
    %v81 = vshrl.u32 %v80, 7
    %v82 = vsub.s32 3, %v81
    %v83 = vrot.slane %v61, %v82
    %v88 = vmul.f32 %v65, %v71
    %v89 = vmul.f32 %v65, %v75
    %v90 = vmul.f32 %v65, %v79
    %v91 = vmul.f32 %v65, %v83
    %s92 = scalar_lea.vmem %s2, 1
    %v93 = vld [vmem:[%s92] ss:$2 sm:$0xf]
    %94 = vset.pattern.permute.xlu0 1
    %95 = vperm.xlu0 %94, %v60
    %v96 = vpop.permute.xlu0 %95
    %v99 = vlaneseq
    %v100 = vshrl.u32 %v99, 7
    %v101 = vsub.s32 0, %v100
    %v102 = vrot.slane %v93, %v101
    %v103 = vlaneseq
    %v104 = vshrl.u32 %v103, 7
    %v105 = vsub.s32 1, %v104
    %v106 = vrot.slane %v93, %v105
    %v107 = vlaneseq
    %v108 = vshrl.u32 %v107, 7
    %v109 = vsub.s32 2, %v108
    %v110 = vrot.slane %v93, %v109
    %v111 = vlaneseq
    %v112 = vshrl.u32 %v111, 7
    %v113 = vsub.s32 3, %v112
    %v114 = vrot.slane %v93, %v113
    %v119 = vmul.f32 %v96, %v102
    %v120 = vmul.f32 %v96, %v106
    %v121 = vmul.f32 %v96, %v110
    %v122 = vmul.f32 %v96, %v114
    %v123 = vadd.f32 %v88, %v119
    %v124 = vadd.f32 %v89, %v120
    %v125 = vadd.f32 %v90, %v121
    %v126 = vadd.f32 %v91, %v122
    %v127 = vld [vmem:[#allocation2] sm:$0xff]
    %v128 = vld [vmem:[#allocation2 + $0x8] sm:$0xff]
    %v129 = vpack.c.bf16 %v127, %v127
    %v130 = vpack.c.bf16 %v128, %v128
    %v131 = vld [vmem:[#allocation5] sm:$0xff]
    %v132 = vld [vmem:[#allocation5 + $0x8] sm:$0xff]
    %v133 = vld [vmem:[#allocation5 + $0x10] sm:$0xff]
    %v134 = vld [vmem:[#allocation5 + $0x18] sm:$0xff]
    %v135 = vld [vmem:[#allocation5 + $0x20] sm:$0xff]
    %v136 = vld [vmem:[#allocation5 + $0x28] sm:$0xff]
    %v137 = vld [vmem:[#allocation5 + $0x30] sm:$0xff]
    %v138 = vld [vmem:[#allocation5 + $0x38] sm:$0xff]
    %v139 = vld [vmem:[#allocation5 + $0x40] sm:$0xff]
    %v140 = vld [vmem:[#allocation5 + $0x48] sm:$0xff]
    %v141 = vld [vmem:[#allocation5 + $0x50] sm:$0xff]
    %v142 = vld [vmem:[#allocation5 + $0x58] sm:$0xff]
    %v143 = vld [vmem:[#allocation5 + $0x60] sm:$0xff]
    %v144 = vld [vmem:[#allocation5 + $0x68] sm:$0xff]
    %v145 = vld [vmem:[#allocation5 + $0x70] sm:$0xff]
    %v146 = vld [vmem:[#allocation5 + $0x78] sm:$0xff]
    %v147 = vld [vmem:[#allocation5 + $0x80] sm:$0xff]
    %v148 = vld [vmem:[#allocation5 + $0x88] sm:$0xff]
    %v149 = vld [vmem:[#allocation5 + $0x90] sm:$0xff]
    %v150 = vld [vmem:[#allocation5 + $0x98] sm:$0xff]
    %v151 = vld [vmem:[#allocation5 + $0xa0] sm:$0xff]
    %v152 = vld [vmem:[#allocation5 + $0xa8] sm:$0xff]
    %v153 = vld [vmem:[#allocation5 + $0xb0] sm:$0xff]
    %v154 = vld [vmem:[#allocation5 + $0xb8] sm:$0xff]
    %v155 = vld [vmem:[#allocation5 + $0xc0] sm:$0xff]
    %v156 = vld [vmem:[#allocation5 + $0xc8] sm:$0xff]
    %v157 = vld [vmem:[#allocation5 + $0xd0] sm:$0xff]
    %v158 = vld [vmem:[#allocation5 + $0xd8] sm:$0xff]
    %v159 = vld [vmem:[#allocation5 + $0xe0] sm:$0xff]
    %v160 = vld [vmem:[#allocation5 + $0xe8] sm:$0xff]
    %v161 = vld [vmem:[#allocation5 + $0xf0] sm:$0xff]
    %v162 = vld [vmem:[#allocation5 + $0xf8] sm:$0xff]
    %v163 = vld [vmem:[#allocation5 + $0x100] sm:$0xff]
    %v164 = vld [vmem:[#allocation5 + $0x108] sm:$0xff]
    %v165 = vld [vmem:[#allocation5 + $0x110] sm:$0xff]
    %v166 = vld [vmem:[#allocation5 + $0x118] sm:$0xff]
    %v167 = vld [vmem:[#allocation5 + $0x120] sm:$0xff]
    %v168 = vld [vmem:[#allocation5 + $0x128] sm:$0xff]
    %v169 = vld [vmem:[#allocation5 + $0x130] sm:$0xff]
    %v170 = vld [vmem:[#allocation5 + $0x138] sm:$0xff]
    %v171 = vld [vmem:[#allocation5 + $0x140] sm:$0xff]
    %v172 = vld [vmem:[#allocation5 + $0x148] sm:$0xff]
    %v173 = vld [vmem:[#allocation5 + $0x150] sm:$0xff]
    %v174 = vld [vmem:[#allocation5 + $0x158] sm:$0xff]
    %v175 = vld [vmem:[#allocation5 + $0x160] sm:$0xff]
    %v176 = vld [vmem:[#allocation5 + $0x168] sm:$0xff]
    %v177 = vld [vmem:[#allocation5 + $0x170] sm:$0xff]
    %v178 = vld [vmem:[#allocation5 + $0x178] sm:$0xff]
    %v179 = vld [vmem:[#allocation5 + $0x180] sm:$0xff]
    %v180 = vld [vmem:[#allocation5 + $0x188] sm:$0xff]
    %v181 = vld [vmem:[#allocation5 + $0x190] sm:$0xff]
    %v182 = vld [vmem:[#allocation5 + $0x198] sm:$0xff]
    %v183 = vld [vmem:[#allocation5 + $0x1a0] sm:$0xff]
    %v184 = vld [vmem:[#allocation5 + $0x1a8] sm:$0xff]
    %v185 = vld [vmem:[#allocation5 + $0x1b0] sm:$0xff]
    %v186 = vld [vmem:[#allocation5 + $0x1b8] sm:$0xff]
    %v187 = vld [vmem:[#allocation5 + $0x1c0] sm:$0xff]
    %v188 = vld [vmem:[#allocation5 + $0x1c8] sm:$0xff]
    %v189 = vld [vmem:[#allocation5 + $0x1d0] sm:$0xff]
    %v190 = vld [vmem:[#allocation5 + $0x1d8] sm:$0xff]
    %v191 = vld [vmem:[#allocation5 + $0x1e0] sm:$0xff]
    %v192 = vld [vmem:[#allocation5 + $0x1e8] sm:$0xff]
    %v193 = vld [vmem:[#allocation5 + $0x1f0] sm:$0xff]
    %v194 = vld [vmem:[#allocation5 + $0x1f8] sm:$0xff]
    %v259 = vunpack.c.l.b16 %v131
    %v260 = vunpack.c.h.b16 %v131
    %v261 = vunpack.c.l.b16 %v132
    %v262 = vunpack.c.h.b16 %v132
    %v263 = vunpack.c.l.b16 %v133
    %v264 = vunpack.c.h.b16 %v133
    %v265 = vunpack.c.l.b16 %v134
    %v266 = vunpack.c.h.b16 %v134
    %v267 = vunpack.c.l.b16 %v135
    %v268 = vunpack.c.h.b16 %v135
    %v269 = vunpack.c.l.b16 %v136
    %v270 = vunpack.c.h.b16 %v136
    %v271 = vunpack.c.l.b16 %v137
    %v272 = vunpack.c.h.b16 %v137
    %v273 = vunpack.c.l.b16 %v138
    %v274 = vunpack.c.h.b16 %v138
    %v275 = vunpack.c.l.b16 %v139
    %v276 = vunpack.c.h.b16 %v139
    %v277 = vunpack.c.l.b16 %v140
    %v278 = vunpack.c.h.b16 %v140
    %v279 = vunpack.c.l.b16 %v141
    %v280 = vunpack.c.h.b16 %v141
    %v281 = vunpack.c.l.b16 %v142
    %v282 = vunpack.c.h.b16 %v142
    %v283 = vunpack.c.l.b16 %v143
    %v284 = vunpack.c.h.b16 %v143
    %v285 = vunpack.c.l.b16 %v144
    %v286 = vunpack.c.h.b16 %v144
    %v287 = vunpack.c.l.b16 %v145
    %v288 = vunpack.c.h.b16 %v145
    %v289 = vunpack.c.l.b16 %v146
    %v290 = vunpack.c.h.b16 %v146
    %v291 = vunpack.c.l.b16 %v147
    %v292 = vunpack.c.h.b16 %v147
    %v293 = vunpack.c.l.b16 %v148
    %v294 = vunpack.c.h.b16 %v148
    %v295 = vunpack.c.l.b16 %v149
    %v296 = vunpack.c.h.b16 %v149
    %v297 = vunpack.c.l.b16 %v150
    %v298 = vunpack.c.h.b16 %v150
    %v299 = vunpack.c.l.b16 %v151
    %v300 = vunpack.c.h.b16 %v151
    %v301 = vunpack.c.l.b16 %v152
    %v302 = vunpack.c.h.b16 %v152
    %v303 = vunpack.c.l.b16 %v153
    %v304 = vunpack.c.h.b16 %v153
    %v305 = vunpack.c.l.b16 %v154
    %v306 = vunpack.c.h.b16 %v154
    %v307 = vunpack.c.l.b16 %v155
    %v308 = vunpack.c.h.b16 %v155
    %v309 = vunpack.c.l.b16 %v156
    %v310 = vunpack.c.h.b16 %v156
    %v311 = vunpack.c.l.b16 %v157
    %v312 = vunpack.c.h.b16 %v157
    %v313 = vunpack.c.l.b16 %v158
    %v314 = vunpack.c.h.b16 %v158
    %v315 = vunpack.c.l.b16 %v159
    %v316 = vunpack.c.h.b16 %v159
    %v317 = vunpack.c.l.b16 %v160
    %v318 = vunpack.c.h.b16 %v160
    %v319 = vunpack.c.l.b16 %v161
    %v320 = vunpack.c.h.b16 %v161
    %v321 = vunpack.c.l.b16 %v162
    %v322 = vunpack.c.h.b16 %v162
    %v323 = vunpack.c.l.b16 %v163
    %v324 = vunpack.c.h.b16 %v163
    %v325 = vunpack.c.l.b16 %v164
    %v326 = vunpack.c.h.b16 %v164
    %v327 = vunpack.c.l.b16 %v165
    %v328 = vunpack.c.h.b16 %v165
    %v329 = vunpack.c.l.b16 %v166
    %v330 = vunpack.c.h.b16 %v166
    %v331 = vunpack.c.l.b16 %v167
    %v332 = vunpack.c.h.b16 %v167
    %v333 = vunpack.c.l.b16 %v168
    %v334 = vunpack.c.h.b16 %v168
    %v335 = vunpack.c.l.b16 %v169
    %v336 = vunpack.c.h.b16 %v169
    %v337 = vunpack.c.l.b16 %v170
    %v338 = vunpack.c.h.b16 %v170
    %v339 = vunpack.c.l.b16 %v171
    %v340 = vunpack.c.h.b16 %v171
    %v341 = vunpack.c.l.b16 %v172
    %v342 = vunpack.c.h.b16 %v172
    %v343 = vunpack.c.l.b16 %v173
    %v344 = vunpack.c.h.b16 %v173
    %v345 = vunpack.c.l.b16 %v174
    %v346 = vunpack.c.h.b16 %v174
    %v347 = vunpack.c.l.b16 %v175
    %v348 = vunpack.c.h.b16 %v175
    %v349 = vunpack.c.l.b16 %v176
    %v350 = vunpack.c.h.b16 %v176
    %v351 = vunpack.c.l.b16 %v177
    %v352 = vunpack.c.h.b16 %v177
    %v353 = vunpack.c.l.b16 %v178
    %v354 = vunpack.c.h.b16 %v178
    %v355 = vunpack.c.l.b16 %v179
    %v356 = vunpack.c.h.b16 %v179
    %v357 = vunpack.c.l.b16 %v180
    %v358 = vunpack.c.h.b16 %v180
    %v359 = vunpack.c.l.b16 %v181
    %v360 = vunpack.c.h.b16 %v181
    %v361 = vunpack.c.l.b16 %v182
    %v362 = vunpack.c.h.b16 %v182
    %v363 = vunpack.c.l.b16 %v183
    %v364 = vunpack.c.h.b16 %v183
    %v365 = vunpack.c.l.b16 %v184
    %v366 = vunpack.c.h.b16 %v184
    %v367 = vunpack.c.l.b16 %v185
    %v368 = vunpack.c.h.b16 %v185
    %v369 = vunpack.c.l.b16 %v186
    %v370 = vunpack.c.h.b16 %v186
    %v371 = vunpack.c.l.b16 %v187
    %v372 = vunpack.c.h.b16 %v187
    %v373 = vunpack.c.l.b16 %v188
    %v374 = vunpack.c.h.b16 %v188
    %v375 = vunpack.c.l.b16 %v189
    %v376 = vunpack.c.h.b16 %v189
    %v377 = vunpack.c.l.b16 %v190
    %v378 = vunpack.c.h.b16 %v190
    %v379 = vunpack.c.l.b16 %v191
    %v380 = vunpack.c.h.b16 %v191
    %v381 = vunpack.c.l.b16 %v192
    %v382 = vunpack.c.h.b16 %v192
    %v383 = vunpack.c.l.b16 %v193
    %v384 = vunpack.c.h.b16 %v193
    %v385 = vunpack.c.l.b16 %v194
    %v386 = vunpack.c.h.b16 %v194
    %v387 = vpack.c.b16 %v263, %v259
    %v388 = vpack.c.b16 %v264, %v260
    %v389 = vpack.c.b16 %v265, %v261
    %v390 = vpack.c.b16 %v266, %v262
    %v391 = vpack.c.b16 %v271, %v267
    %v392 = vpack.c.b16 %v272, %v268
    %v393 = vpack.c.b16 %v273, %v269
    %v394 = vpack.c.b16 %v274, %v270
    %v395 = vpack.c.b16 %v279, %v275
    %v396 = vpack.c.b16 %v280, %v276
    %v397 = vpack.c.b16 %v281, %v277
    %v398 = vpack.c.b16 %v282, %v278
    %v399 = vpack.c.b16 %v287, %v283
    %v400 = vpack.c.b16 %v288, %v284
    %v401 = vpack.c.b16 %v289, %v285
    %v402 = vpack.c.b16 %v290, %v286
    %v403 = vpack.c.b16 %v295, %v291
    %v404 = vpack.c.b16 %v296, %v292
    %v405 = vpack.c.b16 %v297, %v293
    %v406 = vpack.c.b16 %v298, %v294
    %v407 = vpack.c.b16 %v303, %v299
    %v408 = vpack.c.b16 %v304, %v300
    %v409 = vpack.c.b16 %v305, %v301
    %v410 = vpack.c.b16 %v306, %v302
    %v411 = vpack.c.b16 %v311, %v307
    %v412 = vpack.c.b16 %v312, %v308
    %v413 = vpack.c.b16 %v313, %v309
    %v414 = vpack.c.b16 %v314, %v310
    %v415 = vpack.c.b16 %v319, %v315
    %v416 = vpack.c.b16 %v320, %v316
    %v417 = vpack.c.b16 %v321, %v317
    %v418 = vpack.c.b16 %v322, %v318
    %v419 = vpack.c.b16 %v327, %v323
    %v420 = vpack.c.b16 %v328, %v324
    %v421 = vpack.c.b16 %v329, %v325
    %v422 = vpack.c.b16 %v330, %v326
    %v423 = vpack.c.b16 %v335, %v331
    %v424 = vpack.c.b16 %v336, %v332
    %v425 = vpack.c.b16 %v337, %v333
    %v426 = vpack.c.b16 %v338, %v334
    %v427 = vpack.c.b16 %v343, %v339
    %v428 = vpack.c.b16 %v344, %v340
    %v429 = vpack.c.b16 %v345, %v341
    %v430 = vpack.c.b16 %v346, %v342
    %v431 = vpack.c.b16 %v351, %v347
    %v432 = vpack.c.b16 %v352, %v348
    %v433 = vpack.c.b16 %v353, %v349
    %v434 = vpack.c.b16 %v354, %v350
    %v435 = vpack.c.b16 %v359, %v355
    %v436 = vpack.c.b16 %v360, %v356
    %v437 = vpack.c.b16 %v361, %v357
    %v438 = vpack.c.b16 %v362, %v358
    %v439 = vpack.c.b16 %v367, %v363
    %v440 = vpack.c.b16 %v368, %v364
    %v441 = vpack.c.b16 %v369, %v365
    %v442 = vpack.c.b16 %v370, %v366
    %v443 = vpack.c.b16 %v375, %v371
    %v444 = vpack.c.b16 %v376, %v372
    %v445 = vpack.c.b16 %v377, %v373
    %v446 = vpack.c.b16 %v378, %v374
    %v447 = vpack.c.b16 %v383, %v379
    %v448 = vpack.c.b16 %v384, %v380
    %v449 = vpack.c.b16 %v385, %v381
    %v450 = vpack.c.b16 %v386, %v382
    %515 = vmatprep.subr.bf16.mxu0 %v388
    %516 = vmatpush1.bf16.msra.mxu0 %v387
    %517 = vmatprep.subr.bf16.mxu0 %v392
    %518 = vmatpush1.bf16.msra.mxu0 %v391
    %519 = vmatprep.subr.bf16.mxu0 %v396
    %520 = vmatpush1.bf16.msra.mxu0 %v395
    %521 = vmatprep.subr.bf16.mxu0 %v400
    %522 = vmatpush1.bf16.msra.mxu0 %v399
    %523 = vmatprep.subr.bf16.mxu0 %v404
    %524 = vmatpush1.bf16.msra.mxu0 %v403
    %525 = vmatprep.subr.bf16.mxu0 %v408
    %526 = vmatpush1.bf16.msra.mxu0 %v407
    %527 = vmatprep.subr.bf16.mxu0 %v412
    %528 = vmatpush1.bf16.msra.mxu0 %v411
    %529 = vmatprep.subr.bf16.mxu0 %v416
    %530 = vmatpush1.bf16.msra.mxu0 %v415
    %531 = vmatprep.subr.bf16.mxu0 %v420
    %532 = vmatpush1.bf16.msra.mxu0 %v419
    %533 = vmatprep.subr.bf16.mxu0 %v424
    %534 = vmatpush1.bf16.msra.mxu0 %v423
    %535 = vmatprep.subr.bf16.mxu0 %v428
    %536 = vmatpush1.bf16.msra.mxu0 %v427
    %537 = vmatprep.subr.bf16.mxu0 %v432
    %538 = vmatpush1.bf16.msra.mxu0 %v431
    %539 = vmatprep.subr.bf16.mxu0 %v436
    %540 = vmatpush1.bf16.msra.mxu0 %v435
    %541 = vmatprep.subr.bf16.mxu0 %v440
    %542 = vmatpush1.bf16.msra.mxu0 %v439
    %543 = vmatprep.subr.bf16.mxu0 %v444
    %544 = vmatpush1.bf16.msra.mxu0 %v443
    %545 = vmatprep.subr.bf16.mxu0 %v448
    %546 = vmatpush1.bf16.msra.mxu0 %v447
    %547 = vmatprep.mubr.bf16.mxu0 %v130
    %548 = vmatmul.mubr.bf16.gmra.mrb[0].mxu0 %v129
    %v549 = vpop.f32.mrb[0].mxu0
    %v550 = vadd.f32 %v123, %v549
    %v551 = vpop.f32.mrb[0].mxu0
    %v552 = vadd.f32 %v124, %v551
    %v553 = vpop.f32.mrb[0].mxu0
    %v554 = vpop.f32.mrb[0].mxu0
    %555 = vdwg.mxu0
    %556 = vmatprep.subr.bf16.mxu0 %v390
    %557 = vmatpush1.bf16.msra.mxu0 %v389
    %558 = vmatprep.subr.bf16.mxu0 %v394
    %559 = vmatpush1.bf16.msra.mxu0 %v393
    %560 = vmatprep.subr.bf16.mxu0 %v398
    %561 = vmatpush1.bf16.msra.mxu0 %v397
    %562 = vmatprep.subr.bf16.mxu0 %v402
    %563 = vmatpush1.bf16.msra.mxu0 %v401
    %564 = vmatprep.subr.bf16.mxu0 %v406
    %565 = vmatpush1.bf16.msra.mxu0 %v405
    %566 = vmatprep.subr.bf16.mxu0 %v410
    %567 = vmatpush1.bf16.msra.mxu0 %v409
    %568 = vmatprep.subr.bf16.mxu0 %v414
    %569 = vmatpush1.bf16.msra.mxu0 %v413
    %570 = vmatprep.subr.bf16.mxu0 %v418
    %571 = vmatpush1.bf16.msra.mxu0 %v417
    %572 = vmatprep.subr.bf16.mxu0 %v422
    %573 = vmatpush1.bf16.msra.mxu0 %v421
    %574 = vmatprep.subr.bf16.mxu0 %v426
    %575 = vmatpush1.bf16.msra.mxu0 %v425
    %576 = vmatprep.subr.bf16.mxu0 %v430
    %577 = vmatpush1.bf16.msra.mxu0 %v429
    %578 = vmatprep.subr.bf16.mxu0 %v434
    %579 = vmatpush1.bf16.msra.mxu0 %v433
    %580 = vmatprep.subr.bf16.mxu0 %v438
    %581 = vmatpush1.bf16.msra.mxu0 %v437
    %582 = vmatprep.subr.bf16.mxu0 %v442
    %583 = vmatpush1.bf16.msra.mxu0 %v441
    %584 = vmatprep.subr.bf16.mxu0 %v446
    %585 = vmatpush1.bf16.msra.mxu0 %v445
    %586 = vmatprep.subr.bf16.mxu0 %v450
    %587 = vmatpush1.bf16.msra.mxu0 %v449
    %588 = vmatprep.mubr.bf16.mxu0 %v130
    %589 = vmatmul.mubr.bf16.gmra.mrb[0].mxu0 %v129
    %v590 = vpop.f32.mrb[0].mxu0
    %v591 = vadd.f32 %v125, %v590
    %v592 = vpop.f32.mrb[0].mxu0
    %v593 = vadd.f32 %v126, %v592
    %v594 = vpop.f32.mrb[0].mxu0
    %v595 = vpop.f32.mrb[0].mxu0
    %596 = vdwg.mxu0
    %v597 = vmax.f32 %v550, 0.0
    %v598 = vmax.f32 %v552, 0.0
    %v599 = vmax.f32 %v591, 0.0
    %v600 = vmax.f32 %v593, 0.0
    %v601 = vpack.c.bf16 %v597, %v597
    %v602 = vpack.c.bf16 %v598, %v598
    %v603 = vpack.c.bf16 %v599, %v599
    %v604 = vpack.c.bf16 %v600, %v600
    %v605 = vld [vmem:[#allocation7] sm:$0xff]
    %v606 = vld [vmem:[#allocation7 + $0x8] sm:$0xff]
    %v607 = vld [vmem:[#allocation7 + $0x10] sm:$0xff]
    %v608 = vld [vmem:[#allocation7 + $0x18] sm:$0xff]
    %v609 = vld [vmem:[#allocation7 + $0x20] sm:$0xff]
    %v610 = vld [vmem:[#allocation7 + $0x28] sm:$0xff]
    %v611 = vld [vmem:[#allocation7 + $0x30] sm:$0xff]
    %v612 = vld [vmem:[#allocation7 + $0x38] sm:$0xff]
    %v613 = vld [vmem:[#allocation7 + $0x40] sm:$0xff]
    %v614 = vld [vmem:[#allocation7 + $0x48] sm:$0xff]
    %v615 = vld [vmem:[#allocation7 + $0x50] sm:$0xff]
    %v616 = vld [vmem:[#allocation7 + $0x58] sm:$0xff]
    %v617 = vld [vmem:[#allocation7 + $0x60] sm:$0xff]
    %v618 = vld [vmem:[#allocation7 + $0x68] sm:$0xff]
    %v619 = vld [vmem:[#allocation7 + $0x70] sm:$0xff]
    %v620 = vld [vmem:[#allocation7 + $0x78] sm:$0xff]
    %v621 = vld [vmem:[#allocation7 + $0x80] sm:$0xff]
    %v622 = vld [vmem:[#allocation7 + $0x88] sm:$0xff]
    %v623 = vld [vmem:[#allocation7 + $0x90] sm:$0xff]
    %v624 = vld [vmem:[#allocation7 + $0x98] sm:$0xff]
    %v625 = vld [vmem:[#allocation7 + $0xa0] sm:$0xff]
    %v626 = vld [vmem:[#allocation7 + $0xa8] sm:$0xff]
    %v627 = vld [vmem:[#allocation7 + $0xb0] sm:$0xff]
    %v628 = vld [vmem:[#allocation7 + $0xb8] sm:$0xff]
    %v629 = vld [vmem:[#allocation7 + $0xc0] sm:$0xff]
    %v630 = vld [vmem:[#allocation7 + $0xc8] sm:$0xff]
    %v631 = vld [vmem:[#allocation7 + $0xd0] sm:$0xff]
    %v632 = vld [vmem:[#allocation7 + $0xd8] sm:$0xff]
    %v633 = vld [vmem:[#allocation7 + $0xe0] sm:$0xff]
    %v634 = vld [vmem:[#allocation7 + $0xe8] sm:$0xff]
    %v635 = vld [vmem:[#allocation7 + $0xf0] sm:$0xff]
    %v636 = vld [vmem:[#allocation7 + $0xf8] sm:$0xff]
    %v637 = vld [vmem:[#allocation7 + $0x100] sm:$0xff]
    %v638 = vld [vmem:[#allocation7 + $0x108] sm:$0xff]
    %v639 = vld [vmem:[#allocation7 + $0x110] sm:$0xff]
    %v640 = vld [vmem:[#allocation7 + $0x118] sm:$0xff]
    %v641 = vld [vmem:[#allocation7 + $0x120] sm:$0xff]
    %v642 = vld [vmem:[#allocation7 + $0x128] sm:$0xff]
    %v643 = vld [vmem:[#allocation7 + $0x130] sm:$0xff]
    %v644 = vld [vmem:[#allocation7 + $0x138] sm:$0xff]
    %v645 = vld [vmem:[#allocation7 + $0x140] sm:$0xff]
    %v646 = vld [vmem:[#allocation7 + $0x148] sm:$0xff]
    %v647 = vld [vmem:[#allocation7 + $0x150] sm:$0xff]
    %v648 = vld [vmem:[#allocation7 + $0x158] sm:$0xff]
    %v649 = vld [vmem:[#allocation7 + $0x160] sm:$0xff]
    %v650 = vld [vmem:[#allocation7 + $0x168] sm:$0xff]
    %v651 = vld [vmem:[#allocation7 + $0x170] sm:$0xff]
    %v652 = vld [vmem:[#allocation7 + $0x178] sm:$0xff]
    %v653 = vld [vmem:[#allocation7 + $0x180] sm:$0xff]
    %v654 = vld [vmem:[#allocation7 + $0x188] sm:$0xff]
    %v655 = vld [vmem:[#allocation7 + $0x190] sm:$0xff]
    %v656 = vld [vmem:[#allocation7 + $0x198] sm:$0xff]
    %v657 = vld [vmem:[#allocation7 + $0x1a0] sm:$0xff]
    %v658 = vld [vmem:[#allocation7 + $0x1a8] sm:$0xff]
    %v659 = vld [vmem:[#allocation7 + $0x1b0] sm:$0xff]
    %v660 = vld [vmem:[#allocation7 + $0x1b8] sm:$0xff]
    %v661 = vld [vmem:[#allocation7 + $0x1c0] sm:$0xff]
    %v662 = vld [vmem:[#allocation7 + $0x1c8] sm:$0xff]
    %v663 = vld [vmem:[#allocation7 + $0x1d0] sm:$0xff]
    %v664 = vld [vmem:[#allocation7 + $0x1d8] sm:$0xff]
    %v665 = vld [vmem:[#allocation7 + $0x1e0] sm:$0xff]
    %v666 = vld [vmem:[#allocation7 + $0x1e8] sm:$0xff]
    %v667 = vld [vmem:[#allocation7 + $0x1f0] sm:$0xff]
    %v668 = vld [vmem:[#allocation7 + $0x1f8] sm:$0xff]
    %v733 = vunpack.c.l.b16 %v605
    %v734 = vunpack.c.h.b16 %v605
    %v735 = vunpack.c.l.b16 %v606
    %v736 = vunpack.c.h.b16 %v606
    %v737 = vunpack.c.l.b16 %v607
    %v738 = vunpack.c.h.b16 %v607
    %v739 = vunpack.c.l.b16 %v608
    %v740 = vunpack.c.h.b16 %v608
    %v741 = vunpack.c.l.b16 %v609
    %v742 = vunpack.c.h.b16 %v609
    %v743 = vunpack.c.l.b16 %v610
    %v744 = vunpack.c.h.b16 %v610
    %v745 = vunpack.c.l.b16 %v611
    %v746 = vunpack.c.h.b16 %v611
    %v747 = vunpack.c.l.b16 %v612
    %v748 = vunpack.c.h.b16 %v612
    %v749 = vunpack.c.l.b16 %v613
    %v750 = vunpack.c.h.b16 %v613
    %v751 = vunpack.c.l.b16 %v614
    %v752 = vunpack.c.h.b16 %v614
    %v753 = vunpack.c.l.b16 %v615
    %v754 = vunpack.c.h.b16 %v615
    %v755 = vunpack.c.l.b16 %v616
    %v756 = vunpack.c.h.b16 %v616
    %v757 = vunpack.c.l.b16 %v617
    %v758 = vunpack.c.h.b16 %v617
    %v759 = vunpack.c.l.b16 %v618
    %v760 = vunpack.c.h.b16 %v618
    %v761 = vunpack.c.l.b16 %v619
    %v762 = vunpack.c.h.b16 %v619
    %v763 = vunpack.c.l.b16 %v620
    %v764 = vunpack.c.h.b16 %v620
    %v765 = vunpack.c.l.b16 %v621
    %v766 = vunpack.c.h.b16 %v621
    %v767 = vunpack.c.l.b16 %v622
    %v768 = vunpack.c.h.b16 %v622
    %v769 = vunpack.c.l.b16 %v623
    %v770 = vunpack.c.h.b16 %v623
    %v771 = vunpack.c.l.b16 %v624
    %v772 = vunpack.c.h.b16 %v624
    %v773 = vunpack.c.l.b16 %v625
    %v774 = vunpack.c.h.b16 %v625
    %v775 = vunpack.c.l.b16 %v626
    %v776 = vunpack.c.h.b16 %v626
    %v777 = vunpack.c.l.b16 %v627
    %v778 = vunpack.c.h.b16 %v627
    %v779 = vunpack.c.l.b16 %v628
    %v780 = vunpack.c.h.b16 %v628
    %v781 = vunpack.c.l.b16 %v629
    %v782 = vunpack.c.h.b16 %v629
    %v783 = vunpack.c.l.b16 %v630
    %v784 = vunpack.c.h.b16 %v630
    %v785 = vunpack.c.l.b16 %v631
    %v786 = vunpack.c.h.b16 %v631
    %v787 = vunpack.c.l.b16 %v632
    %v788 = vunpack.c.h.b16 %v632
    %v789 = vunpack.c.l.b16 %v633
    %v790 = vunpack.c.h.b16 %v633
    %v791 = vunpack.c.l.b16 %v634
    %v792 = vunpack.c.h.b16 %v634
    %v793 = vunpack.c.l.b16 %v635
    %v794 = vunpack.c.h.b16 %v635
    %v795 = vunpack.c.l.b16 %v636
    %v796 = vunpack.c.h.b16 %v636
    %v797 = vunpack.c.l.b16 %v637
    %v798 = vunpack.c.h.b16 %v637
    %v799 = vunpack.c.l.b16 %v638
    %v800 = vunpack.c.h.b16 %v638
    %v801 = vunpack.c.l.b16 %v639
    %v802 = vunpack.c.h.b16 %v639
    %v803 = vunpack.c.l.b16 %v640
    %v804 = vunpack.c.h.b16 %v640
    %v805 = vunpack.c.l.b16 %v641
    %v806 = vunpack.c.h.b16 %v641
    %v807 = vunpack.c.l.b16 %v642
    %v808 = vunpack.c.h.b16 %v642
    %v809 = vunpack.c.l.b16 %v643
    %v810 = vunpack.c.h.b16 %v643
    %v811 = vunpack.c.l.b16 %v644
    %v812 = vunpack.c.h.b16 %v644
    %v813 = vunpack.c.l.b16 %v645
    %v814 = vunpack.c.h.b16 %v645
    %v815 = vunpack.c.l.b16 %v646
    %v816 = vunpack.c.h.b16 %v646
    %v817 = vunpack.c.l.b16 %v647
    %v818 = vunpack.c.h.b16 %v647
    %v819 = vunpack.c.l.b16 %v648
    %v820 = vunpack.c.h.b16 %v648
    %v821 = vunpack.c.l.b16 %v649
    %v822 = vunpack.c.h.b16 %v649
    %v823 = vunpack.c.l.b16 %v650
    %v824 = vunpack.c.h.b16 %v650
    %v825 = vunpack.c.l.b16 %v651
    %v826 = vunpack.c.h.b16 %v651
    %v827 = vunpack.c.l.b16 %v652
    %v828 = vunpack.c.h.b16 %v652
    %v829 = vunpack.c.l.b16 %v653
    %v830 = vunpack.c.h.b16 %v653
    %v831 = vunpack.c.l.b16 %v654
    %v832 = vunpack.c.h.b16 %v654
    %v833 = vunpack.c.l.b16 %v655
    %v834 = vunpack.c.h.b16 %v655
    %v835 = vunpack.c.l.b16 %v656
    %v836 = vunpack.c.h.b16 %v656
    %v837 = vunpack.c.l.b16 %v657
    %v838 = vunpack.c.h.b16 %v657
    %v839 = vunpack.c.l.b16 %v658
    %v840 = vunpack.c.h.b16 %v658
    %v841 = vunpack.c.l.b16 %v659
    %v842 = vunpack.c.h.b16 %v659
    %v843 = vunpack.c.l.b16 %v660
    %v844 = vunpack.c.h.b16 %v660
    %v845 = vunpack.c.l.b16 %v661
    %v846 = vunpack.c.h.b16 %v661
    %v847 = vunpack.c.l.b16 %v662
    %v848 = vunpack.c.h.b16 %v662
    %v849 = vunpack.c.l.b16 %v663
    %v850 = vunpack.c.h.b16 %v663
    %v851 = vunpack.c.l.b16 %v664
    %v852 = vunpack.c.h.b16 %v664
    %v853 = vunpack.c.l.b16 %v665
    %v854 = vunpack.c.h.b16 %v665
    %v855 = vunpack.c.l.b16 %v666
    %v856 = vunpack.c.h.b16 %v666
    %v857 = vunpack.c.l.b16 %v667
    %v858 = vunpack.c.h.b16 %v667
    %v859 = vunpack.c.l.b16 %v668
    %v860 = vunpack.c.h.b16 %v668
    %v861 = vpack.c.b16 %v735, %v733
    %v862 = vpack.c.b16 %v736, %v734
    %v863 = vpack.c.b16 %v739, %v737
    %v864 = vpack.c.b16 %v740, %v738
    %v865 = vpack.c.b16 %v743, %v741
    %v866 = vpack.c.b16 %v744, %v742
    %v867 = vpack.c.b16 %v747, %v745
    %v868 = vpack.c.b16 %v748, %v746
    %v869 = vpack.c.b16 %v751, %v749
    %v870 = vpack.c.b16 %v752, %v750
    %v871 = vpack.c.b16 %v755, %v753
    %v872 = vpack.c.b16 %v756, %v754
    %v873 = vpack.c.b16 %v759, %v757
    %v874 = vpack.c.b16 %v760, %v758
    %v875 = vpack.c.b16 %v763, %v761
    %v876 = vpack.c.b16 %v764, %v762
    %v877 = vpack.c.b16 %v767, %v765
    %v878 = vpack.c.b16 %v768, %v766
    %v879 = vpack.c.b16 %v771, %v769
    %v880 = vpack.c.b16 %v772, %v770
    %v881 = vpack.c.b16 %v775, %v773
    %v882 = vpack.c.b16 %v776, %v774
    %v883 = vpack.c.b16 %v779, %v777
    %v884 = vpack.c.b16 %v780, %v778
    %v885 = vpack.c.b16 %v783, %v781
    %v886 = vpack.c.b16 %v784, %v782
    %v887 = vpack.c.b16 %v787, %v785
    %v888 = vpack.c.b16 %v788, %v786
    %v889 = vpack.c.b16 %v791, %v789
    %v890 = vpack.c.b16 %v792, %v790
    %v891 = vpack.c.b16 %v795, %v793
    %v892 = vpack.c.b16 %v796, %v794
    %v893 = vpack.c.b16 %v799, %v797
    %v894 = vpack.c.b16 %v800, %v798
    %v895 = vpack.c.b16 %v803, %v801
    %v896 = vpack.c.b16 %v804, %v802
    %v897 = vpack.c.b16 %v807, %v805
    %v898 = vpack.c.b16 %v808, %v806
    %v899 = vpack.c.b16 %v811, %v809
    %v900 = vpack.c.b16 %v812, %v810
    %v901 = vpack.c.b16 %v815, %v813
    %v902 = vpack.c.b16 %v816, %v814
    %v903 = vpack.c.b16 %v819, %v817
    %v904 = vpack.c.b16 %v820, %v818
    %v905 = vpack.c.b16 %v823, %v821
    %v906 = vpack.c.b16 %v824, %v822
    %v907 = vpack.c.b16 %v827, %v825
    %v908 = vpack.c.b16 %v828, %v826
    %v909 = vpack.c.b16 %v831, %v829
    %v910 = vpack.c.b16 %v832, %v830
    %v911 = vpack.c.b16 %v835, %v833
    %v912 = vpack.c.b16 %v836, %v834
    %v913 = vpack.c.b16 %v839, %v837
    %v914 = vpack.c.b16 %v840, %v838
    %v915 = vpack.c.b16 %v843, %v841
    %v916 = vpack.c.b16 %v844, %v842
    %v917 = vpack.c.b16 %v847, %v845
    %v918 = vpack.c.b16 %v848, %v846
    %v919 = vpack.c.b16 %v851, %v849
    %v920 = vpack.c.b16 %v852, %v850
    %v921 = vpack.c.b16 %v855, %v853
    %v922 = vpack.c.b16 %v856, %v854
    %v923 = vpack.c.b16 %v859, %v857
    %v924 = vpack.c.b16 %v860, %v858
    %989 = vmatprep.subr.bf16.mxu0 %v862
    %990 = vmatpush1.bf16.msra.mxu0 %v861
    %991 = vmatprep.subr.bf16.mxu0 %v864
    %992 = vmatpush1.bf16.msra.mxu0 %v863
    %993 = vmatprep.subr.bf16.mxu0 %v866
    %994 = vmatpush1.bf16.msra.mxu0 %v865
    %995 = vmatprep.subr.bf16.mxu0 %v868
    %996 = vmatpush1.bf16.msra.mxu0 %v867
    %997 = vmatprep.subr.bf16.mxu0 %v870
    %998 = vmatpush1.bf16.msra.mxu0 %v869
    %999 = vmatprep.subr.bf16.mxu0 %v872
    %1000 = vmatpush1.bf16.msra.mxu0 %v871
    %1001 = vmatprep.subr.bf16.mxu0 %v874
    %1002 = vmatpush1.bf16.msra.mxu0 %v873
    %1003 = vmatprep.subr.bf16.mxu0 %v876
    %1004 = vmatpush1.bf16.msra.mxu0 %v875
    %1005 = vmatprep.subr.bf16.mxu0 %v878
    %1006 = vmatpush1.bf16.msra.mxu0 %v877
    %1007 = vmatprep.subr.bf16.mxu0 %v880
    %1008 = vmatpush1.bf16.msra.mxu0 %v879
    %1009 = vmatprep.subr.bf16.mxu0 %v882
    %1010 = vmatpush1.bf16.msra.mxu0 %v881
    %1011 = vmatprep.subr.bf16.mxu0 %v884
    %1012 = vmatpush1.bf16.msra.mxu0 %v883
    %1013 = vmatprep.subr.bf16.mxu0 %v886
    %1014 = vmatpush1.bf16.msra.mxu0 %v885
    %1015 = vmatprep.subr.bf16.mxu0 %v888
    %1016 = vmatpush1.bf16.msra.mxu0 %v887
    %1017 = vmatprep.subr.bf16.mxu0 %v890
    %1018 = vmatpush1.bf16.msra.mxu0 %v889
    %1019 = vmatprep.subr.bf16.mxu0 %v892
    %1020 = vmatpush1.bf16.msra.mxu0 %v891
    %1021 = vmatprep.mubr.bf16.mxu0 %v602
    %1022 = vmatmul.mubr.bf16.gmra.mrb[0].mxu0 %v601
    %v1023 = vpop.f32.mrb[0].mxu0
    %v1024 = vadd.f32 0.0, %v1023
    %v1025 = vpop.f32.mrb[0].mxu0
    %v1026 = vadd.f32 0.0, %v1025
    %v1027 = vpop.f32.mrb[0].mxu0
    %v1028 = vpop.f32.mrb[0].mxu0
    %1029 = vdwg.mxu0
    %1030 = vmatprep.subr.bf16.mxu0 %v894
    %1031 = vmatpush1.bf16.msra.mxu0 %v893
    %1032 = vmatprep.subr.bf16.mxu0 %v896
    %1033 = vmatpush1.bf16.msra.mxu0 %v895
    %1034 = vmatprep.subr.bf16.mxu0 %v898
    %1035 = vmatpush1.bf16.msra.mxu0 %v897
    %1036 = vmatprep.subr.bf16.mxu0 %v900
    %1037 = vmatpush1.bf16.msra.mxu0 %v899
    %1038 = vmatprep.subr.bf16.mxu0 %v902
    %1039 = vmatpush1.bf16.msra.mxu0 %v901
    %1040 = vmatprep.subr.bf16.mxu0 %v904
    %1041 = vmatpush1.bf16.msra.mxu0 %v903
    %1042 = vmatprep.subr.bf16.mxu0 %v906
    %1043 = vmatpush1.bf16.msra.mxu0 %v905
    %1044 = vmatprep.subr.bf16.mxu0 %v908
    %1045 = vmatpush1.bf16.msra.mxu0 %v907
    %1046 = vmatprep.subr.bf16.mxu0 %v910
    %1047 = vmatpush1.bf16.msra.mxu0 %v909
    %1048 = vmatprep.subr.bf16.mxu0 %v912
    %1049 = vmatpush1.bf16.msra.mxu0 %v911
    %1050 = vmatprep.subr.bf16.mxu0 %v914
    %1051 = vmatpush1.bf16.msra.mxu0 %v913
    %1052 = vmatprep.subr.bf16.mxu0 %v916
    %1053 = vmatpush1.bf16.msra.mxu0 %v915
    %1054 = vmatprep.subr.bf16.mxu0 %v918
    %1055 = vmatpush1.bf16.msra.mxu0 %v917
    %1056 = vmatprep.subr.bf16.mxu0 %v920
    %1057 = vmatpush1.bf16.msra.mxu0 %v919
    %1058 = vmatprep.subr.bf16.mxu0 %v922
    %1059 = vmatpush1.bf16.msra.mxu0 %v921
    %1060 = vmatprep.subr.bf16.mxu0 %v924
    %1061 = vmatpush1.bf16.msra.mxu0 %v923
    %1062 = vmatprep.mubr.bf16.mxu0 %v604
    %1063 = vmatmul.mubr.bf16.gmra.mrb[0].mxu0 %v603
    %v1064 = vpop.f32.mrb[0].mxu0
    %v1065 = vadd.f32 %v1024, %v1064
    %v1066 = vpop.f32.mrb[0].mxu0
    %v1067 = vadd.f32 %v1026, %v1066
    %v1068 = vpop.f32.mrb[0].mxu0
    %v1069 = vpop.f32.mrb[0].mxu0
    %1070 = vdwg.mxu0
    %1071 = vst [vmem:[#allocation8] sm:$0xff] %v1065
    %1072 = vst [vmem:[#allocation8 + $0x8] sm:$0xff] %v1067
    // Predicated region
    $region34: #{tpu_custom_call.1} parent=1 // pred_check
      _
    $region35: #{tpu_custom_call.1} parent=1 // pred_check_branch
      %1074 = sbr.rel (0) target = $region37
    $region36: #{tpu_custom_call.1} parent=1 // pred_region
      %s1076 = ssub.s32 256, 256
      %1077 = vsyncadd [#allocation4], %s1076
      %s1079 = sshll.u32 [#allocation8], 4
      %s1080 = int_to_ptr.vmem [resolvable:$true] %s1079
      %1082 = dma.vmem_to_hbm [thread:$0]  %s1080, 256, %s5, [#allocation4]
    $region37: #{tpu_custom_call.1} parent=1 // pred_fallthru
      _
    // Predicated region
    $region38: #{tpu_custom_call.1} parent=1 // pred_check
      _
    $region39: #{tpu_custom_call.1} parent=1 // pred_check_branch
      %1084 = sbr.rel (0) target = $region41
    $region40: #{tpu_custom_call.1} parent=1 // pred_region
      %1085 = dma.done [#allocation4], 256
    $region41: #{tpu_custom_call.1} parent=1 // pred_fallthru
      _
    %1086 = vsyncpa [#allocation3], 1
    %1087 = vsyncpa [#allocation6], 1
    %1088 = vsyncpa [#allocation4], 1

</llo_original>
